<compile_context>
chip_gen: v7x
topology: tpu7x:2x2x1
jax: 0.10.0
libtpu: 0.0.40
codegen_flags: <defaults>
</compile_context>

<pallas_src>
import functools
import math

import jax
import jax.numpy as jnp
from jax.experimental import pallas as pl
from jax.experimental.pallas import tpu as pltpu


def _gelu_erf(x):
    # exact-erf GELU, identical to the reference: x * 0.5 * (1 + erf(x / sqrt(2)))
    # (kept in f32 inside the kernel; the tanh/EUP variant would not match
    #  PyTorch's erf GELU bit-for-bit)
    return x * 0.5 * (1.0 + jax.lax.erf(x / math.sqrt(2.0)))


def _round_up(a, b):
    return (a + b - 1) // b * b


def _vmem_budget_bytes():
    """Per-core VMEM budget: ~80% of physical capacity (128 MiB on v5e/v6e,
    64 MiB per TC on v7x). Conservative fallback if the query is unavailable."""
    try:
        cap = int(getattr(pltpu.get_tpu_info(), "vmem_capacity_bytes"))
    except Exception:
        cap = 64 << 20
    return max(32 << 20, int(cap * 0.80))


# --------------------------------------------------------------------------
# Kernel bodies
# --------------------------------------------------------------------------
def _mlp_kernel_out_acc(tk, x_ref, w1_ref, b1_ref, w2_ref, b2_ref, o_ref):
    """f32 output: accumulate directly into the VMEM-resident output block."""
    k = pl.program_id(1)

    @pl.when(k == 0)
    def _init():
        o_ref[...] = jnp.broadcast_to(b2_ref[...], o_ref.shape)

    # fc1 partial: (tm, Din_p) @ (Din_p, tk) -> f32, + bias slice, exact-erf GELU
    h = jnp.dot(x_ref[...], w1_ref[...], preferred_element_type=jnp.float32)
    b1 = b1_ref[:, pl.ds(pl.multiple_of(k * tk, 128), tk)]
    h = _gelu_erf(h + b1)
    h = h.astype(w2_ref.dtype)

    # fc2 partial accumulate: (tm, tk) @ (tk, Dout_p) -> f32 output block
    o_ref[...] += jnp.dot(h, w2_ref[...], preferred_element_type=jnp.float32)


def _mlp_kernel_scratch_acc(tk, x_ref, w1_ref, b1_ref, w2_ref, b2_ref, o_ref, acc_ref):
    """non-f32 output: f32 scratch accumulator, cast+store at the last k."""
    k = pl.program_id(1)

    @pl.when(k == 0)
    def _init():
        acc_ref[...] = jnp.broadcast_to(b2_ref[...], acc_ref.shape)

    h = jnp.dot(x_ref[...], w1_ref[...], preferred_element_type=jnp.float32)
    b1 = b1_ref[:, pl.ds(pl.multiple_of(k * tk, 128), tk)]
    h = _gelu_erf(h + b1)
    h = h.astype(w2_ref.dtype)
    acc_ref[...] += jnp.dot(h, w2_ref[...], preferred_element_type=jnp.float32)

    @pl.when(k == pl.num_programs(1) - 1)
    def _finalize():
        o_ref[...] = acc_ref[...].astype(o_ref.dtype)


# --------------------------------------------------------------------------
# Weight preparation (pad + cast ONCE, reuse across calls)
# --------------------------------------------------------------------------
def prepare_mlp_weights(w1, b1, w2, b2, *, tk=512, compute_dtype=jnp.bfloat16):
    """w1: (in, hidden); b1: (hidden,); w2: (hidden, out); b2: (out,).

    Pads feature dims to 128-multiples (hidden to a tk-multiple), casts weights
    to compute_dtype (default bf16 -> MXU-rate operands, halved weight bytes),
    keeps biases f32. Returns (padded_arrays, static_plan)."""
    Din, Dh = w1.shape
    Dh2, Dout = w2.shape
    assert Dh2 == Dh and b1.shape == (Dh,) and b2.shape == (Dout,)

    Din_p = _round_up(Din, 128)
    Dout_p = _round_up(Dout, 128)

    csize = jnp.dtype(compute_dtype).itemsize
    budget = _vmem_budget_bytes()
    tk = max(128, min(int(tk), _round_up(Dh, 128)))
    # v7x-class (64 MiB) retile: if the double-buffered weight k-tiles alone
    # would eat more than half the budget, drop tk 512 -> 256.
    if tk >= 512 and 2 * tk * (Din_p + Dout_p) * csize > budget // 2:
        tk = 256
    Dh_p = _round_up(Dh, tk)

    arrays = dict(
        w1=jnp.pad(w1, ((0, Din_p - Din), (0, Dh_p - Dh))).astype(compute_dtype),
        b1=jnp.pad(b1, (0, Dh_p - Dh)).reshape(1, Dh_p).astype(jnp.float32),
        w2=jnp.pad(w2, ((0, Dh_p - Dh), (0, Dout_p - Dout))).astype(compute_dtype),
        b2=jnp.pad(b2, (0, Dout_p - Dout)).reshape(1, Dout_p).astype(jnp.float32),
    )
    plan = dict(Din=Din, Dh=Dh, Dout=Dout, Din_p=Din_p, Dh_p=Dh_p, Dout_p=Dout_p,
                tk=tk, compute_dtype=compute_dtype)
    return arrays, plan


def _plan_bytes(tm, tk, Din_p, Dh_p, Dout_p, csize, osize, use_scratch):
    # double-buffered pipelined blocks + resident biases + (optional) f32 scratch
    b = 2 * (tm * Din_p * csize          # x row tile
             + Din_p * tk * csize        # w1 k-tile
             + tk * Dout_p * csize       # w2 k-tile
             + tm * Dout_p * osize)      # output tile
    b += 2 * (Dh_p * 4 + Dout_p * 4)     # b1 (full, f32) + b2 (f32)
    if use_scratch:
        b += tm * Dout_p * 4             # f32 accumulator scratch
    return b


# --------------------------------------------------------------------------
# Forward pass (pads x only; weights are pre-padded/pre-cast)
# --------------------------------------------------------------------------
def mlp_forward(x, prepared, *, tm=512):
    """x: (M, in_features) -> (M, out_features) in x.dtype."""
    arrays, plan = prepared
    M, Din = x.shape
    assert Din == plan["Din"]
    Din_p, Dh_p, Dout_p = plan["Din_p"], plan["Dh_p"], plan["Dout_p"]
    Dout = plan["Dout"]
    tk = plan["tk"]
    compute_dtype = plan["compute_dtype"]
    out_dtype = x.dtype

    csize = jnp.dtype(compute_dtype).itemsize
    osize = jnp.dtype(out_dtype).itemsize
    use_scratch = (out_dtype != jnp.float32)
    budget = _vmem_budget_bytes()

    # --- row tile plan -----------------------------------------------------
    tm = max(8, min(int(tm), _round_up(M, 8)))      # don't over-pad tiny M
    if M >= 512 and _round_up(M, tm) // tm < 2:
        # megacore (v7x): keep >=2 row tiles so both TensorCores get work
        tm = min(tm, _round_up(-(-M // 2), 128))
    # shrink tm if the double-buffered plan would blow the VMEM budget
    while _plan_bytes(tm, tk, Din_p, Dh_p, Dout_p, csize, osize, use_scratch) > budget and tm > 128:
        tm = max(128, tm // 2)
    Mp = _round_up(M, tm)

    grid = (Mp // tm, Dh_p // tk)                   # rows parallel, hidden-k last

    plan_bytes = _plan_bytes(tm, tk, Din_p, Dh_p, Dout_p, csize, osize, use_scratch)
    vmem_limit = max(32 << 20, min(plan_bytes + (8 << 20), budget))

    # --- pad x only (exact: padded cols/rows contribute 0) ------------------
    x_p = jnp.pad(x, ((0, Mp - M), (0, Din_p - Din))).astype(compute_dtype)

    in_specs = [
        pl.BlockSpec((tm, Din_p), lambda i, k: (i, 0)),     # x row tile
        pl.BlockSpec((Din_p, tk), lambda i, k: (0, k)),     # w1 k-tile
        pl.BlockSpec((1, Dh_p), lambda i, k: (0, 0)),       # b1 (full, resident)
        pl.BlockSpec((tk, Dout_p), lambda i, k: (k, 0)),    # w2 k-tile
        pl.BlockSpec((1, Dout_p), lambda i, k: (0, 0)),     # b2 (full, resident)
    ]
    out_spec = pl.BlockSpec((tm, Dout_p), lambda i, k: (i, 0))

    if use_scratch:
        kernel = functools.partial(_mlp_kernel_scratch_acc, tk)
        scratch_shapes = [pltpu.VMEM((tm, Dout_p), jnp.float32)]
    else:
        kernel = functools.partial(_mlp_kernel_out_acc, tk)
        scratch_shapes = []

    out_p = pl.pallas_call(
        kernel,
        out_shape=jax.ShapeDtypeStruct((Mp, Dout_p), out_dtype),
        grid_spec=pltpu.PrefetchScalarGridSpec(
            num_scalar_prefetch=0,
            grid=grid,
            in_specs=in_specs,
            out_specs=out_spec,
            scratch_shapes=scratch_shapes,
        ),
        compiler_params=pltpu.CompilerParams(
            dimension_semantics=("parallel", "arbitrary"),
            vmem_limit_bytes=int(vmem_limit),
        ),
    )(x_p, arrays["w1"], arrays["b1"], arrays["w2"], arrays["b2"])

    return out_p[:M, :Dout]


def mlp_apply(x, w1, b1, w2, b2, *, tm=512, tk=512, compute_dtype=jnp.bfloat16):
    """One-shot convenience (prepares weights then runs). For repeated calls,
    call prepare_mlp_weights() once and reuse the result."""
    prepared = prepare_mlp_weights(w1, b1, w2, b2, tk=tk, compute_dtype=compute_dtype)
    return mlp_forward(x, prepared, tm=tm)


def init_mlp_params(key, in_features, hidden_features, out_features, dtype=jnp.float32):
    """Deterministic nn.Linear-style init (uniform +/- 1/sqrt(fan_in)).
       Weights returned already transposed to (in_dim, out_dim)."""
    k1, k2, k3, k4 = jax.random.split(key, 4)
    bound1 = 1.0 / math.sqrt(in_features)
    bound2 = 1.0 / math.sqrt(hidden_features)
    w1 = jax.random.uniform(k1, (in_features, hidden_features), dtype, -bound1, bound1)
    b1 = jax.random.uniform(k2, (hidden_features,), dtype, -bound1, bound1)
    w2 = jax.random.uniform(k3, (hidden_features, out_features), dtype, -bound2, bound2)
    b2 = jax.random.uniform(k4, (out_features,), dtype, -bound2, bound2)
    return w1, b1, w2, b2


if __name__ == "__main__":
    key = jax.random.PRNGKey(0)
    kx, kp = jax.random.split(key)

    batch, seq = 2, 8
    in_features, hidden_features, out_features = 32, 64, 32

    # input shaped like a transformer token stream: (batch, seq, in_features)
    x = jax.random.normal(kx, (batch, seq, in_features), jnp.float32)
    w1, b1, w2, b2 = init_mlp_params(kp, in_features, hidden_features, out_features)

    x2d = x.reshape(batch * seq, in_features)

    # pure-JAX reference of the PyTorch module (dropout p=0 -> identity)
    ref = _gelu_erf(x2d @ w1 + b1) @ w2 + b2

    # f32-operand path: matches the reference tightly
    params_f32 = prepare_mlp_weights(w1, b1, w2, b2, compute_dtype=jnp.float32)
    out_f32 = mlp_forward(x2d, params_f32)
    jax.block_until_ready(out_f32)
    assert jnp.allclose(out_f32, ref, atol=1e-4, rtol=1e-4), "f32 mismatch vs reference"

    # default path: bf16 MXU operands, f32 accumulation -> loose tolerance
    params_bf16 = prepare_mlp_weights(w1, b1, w2, b2)   # compute_dtype=bfloat16
    out_bf16 = mlp_forward(x2d, params_bf16)
    jax.block_until_ready(out_bf16)
    assert jnp.allclose(out_bf16, ref, atol=1e-1, rtol=1e-1), "bf16 mismatch vs reference"

    out = out_f32.reshape(batch, seq, out_features)
    jax.block_until_ready(out)

    print("KERNEL_OK")
</pallas_src>

<mosaic_0001>
module attributes {stable_mosaic.version = 11 : i64} {
  func.func @_mlp_kernel_out_acc(%arg0: i32, %arg1: i32, %arg2: memref<16x128xf32, #tpu.memory_space<vmem>>, %arg3: memref<128x128xf32, #tpu.memory_space<vmem>>, %arg4: memref<1x128xf32, #tpu.memory_space<vmem>>, %arg5: memref<128x128xf32, #tpu.memory_space<vmem>>, %arg6: memref<1x128xf32, #tpu.memory_space<vmem>>, %arg7: memref<16x128xf32, #tpu.memory_space<vmem>>) attributes {dimension_semantics = [#tpu.dimension_semantics<parallel>, #tpu.dimension_semantics<arbitrary>], iteration_bounds = array<i64: 1, 1>, scalar_prefetch = 0 : i64, scratch_operands = 0 : i64, tpu.core_type = #tpu.core_type<tc>, window_params = [{transform_indices = @transform_0, window_bounds = array<i64: 16, 128>}, {transform_indices = @transform_1, window_bounds = array<i64: 128, 128>}, {pipeline_mode = #tpu.pipeline_mode<synchronous>, transform_indices = @transform_2, window_bounds = array<i64: 1, 128>}, {transform_indices = @transform_3, window_bounds = array<i64: 128, 128>}, {pipeline_mode = #tpu.pipeline_mode<synchronous>, transform_indices = @transform_4, window_bounds = array<i64: 1, 128>}, {transform_indices = @transform_5, window_bounds = array<i64: 16, 128>}]} {
    %c0_i32 = arith.constant 0 : i32
    %0 = arith.cmpi eq, %arg1, %c0_i32 : i32
    %1 = arith.extui %0 : i1 to i32
    %c0_i32_0 = arith.constant 0 : i32
    %2 = arith.cmpi ne, %1, %c0_i32_0 : i32
    scf.if %2 {
      %c0_15 = arith.constant 0 : index
      %c0_16 = arith.constant 0 : index
      %25 = vector.load %arg6[%c0_15, %c0_16] : memref<1x128xf32, #tpu.memory_space<vmem>>, vector<1x128xf32>
      %26 = vector.shape_cast %25 : vector<1x128xf32> to vector<1x128xf32>
      %27 = vector.broadcast %26 : vector<1x128xf32> to vector<16x128xf32>
      %c0_17 = arith.constant 0 : index
      %c0_18 = arith.constant 0 : index
      %28 = vector.load %arg7[%c0_17, %c0_18] : memref<16x128xf32, #tpu.memory_space<vmem>>, vector<16x128xf32>
      tpu.vector_store %arg7[%c0_17, %c0_18], %27 {strides = array<i32>} : memref<16x128xf32, #tpu.memory_space<vmem>>, vector<16x128xf32>,
    } else {
    }
    %c0 = arith.constant 0 : index
    %c0_1 = arith.constant 0 : index
    %3 = vector.load %arg2[%c0, %c0_1] : memref<16x128xf32, #tpu.memory_space<vmem>>, vector<16x128xf32>
    %c0_2 = arith.constant 0 : index
    %c0_3 = arith.constant 0 : index
    %4 = vector.load %arg3[%c0_2, %c0_3] : memref<128x128xf32, #tpu.memory_space<vmem>>, vector<128x128xf32>
    %cst = arith.constant dense<0.000000e+00> : vector<16x128xf32>
    %5 = tpu.matmul %3, %4, %cst {dimension_numbers = #tpu.dot_dimension_numbers<[1], [0], [0], [1], [0, 0, 1, 1], [], []>} : vector<16x128xf32>, vector<128x128xf32>, vector<16x128xf32> -> vector<16x128xf32>
    %c128_i32 = arith.constant 128 : i32
    %6 = arith.muli %arg1, %c128_i32 : i32
    %7 = tpu.assume_multiple %6, 128 : i32
    %c0_4 = arith.constant 0 : index
    %8 = arith.index_cast %7 : i32 to index
    %9 = vector.load %arg4[%c0_4, %8] : memref<1x128xf32, #tpu.memory_space<vmem>>, vector<1x128xf32>
    %10 = vector.broadcast %9 : vector<1x128xf32> to vector<16x128xf32>
    %11 = arith.addf %5, %10 : vector<16x128xf32>
    %cst_5 = arith.constant 5.000000e-01 : f32
    %12 = vector.broadcast %cst_5 : f32 to vector<16x128xf32>
    %13 = arith.mulf %11, %12 : vector<16x128xf32>
    %cst_6 = arith.constant 1.41421354 : f32
    %14 = vector.broadcast %cst_6 : f32 to vector<16x128xf32>
    %15 = arith.divf %11, %14 : vector<16x128xf32>
    %16 = math.erf %15 : vector<16x128xf32>
    %cst_7 = arith.constant 1.000000e+00 : f32
    %17 = vector.broadcast %cst_7 : f32 to vector<16x128xf32>
    %18 = arith.addf %17, %16 : vector<16x128xf32>
    %19 = arith.mulf %13, %18 : vector<16x128xf32>
    %c0_8 = arith.constant 0 : index
    %c0_9 = arith.constant 0 : index
    %20 = vector.load %arg7[%c0_8, %c0_9] : memref<16x128xf32, #tpu.memory_space<vmem>>, vector<16x128xf32>
    %c0_10 = arith.constant 0 : index
    %c0_11 = arith.constant 0 : index
    %21 = vector.load %arg5[%c0_10, %c0_11] : memref<128x128xf32, #tpu.memory_space<vmem>>, vector<128x128xf32>
    %cst_12 = arith.constant dense<0.000000e+00> : vector<16x128xf32>
    %22 = tpu.matmul %19, %21, %cst_12 {dimension_numbers = #tpu.dot_dimension_numbers<[1], [0], [0], [1], [0, 0, 1, 1], [], []>} : vector<16x128xf32>, vector<128x128xf32>, vector<16x128xf32> -> vector<16x128xf32>
    %23 = arith.addf %20, %22 : vector<16x128xf32>
    %c0_13 = arith.constant 0 : index
    %c0_14 = arith.constant 0 : index
    %24 = vector.load %arg7[%c0_13, %c0_14] : memref<16x128xf32, #tpu.memory_space<vmem>>, vector<16x128xf32>
    tpu.vector_store %arg7[%c0_13, %c0_14], %23 {strides = array<i32>} : memref<16x128xf32, #tpu.memory_space<vmem>>, vector<16x128xf32>,
    return
  }
  func.func @transform_0(%arg0: i32, %arg1: i32) -> (i32, i32) {
    %c0_i32 = arith.constant 0 : i32
    %c0_i32_0 = arith.constant 0 : i32
    return %arg0, %c0_i32 : i32, i32
  }
  func.func @transform_1(%arg0: i32, %arg1: i32) -> (i32, i32) {
    %c0_i32 = arith.constant 0 : i32
    %c0_i32_0 = arith.constant 0 : i32
    return %c0_i32, %arg1 : i32, i32
  }
  func.func @transform_2(%arg0: i32, %arg1: i32) -> (i32, i32) {
    %c0_i32 = arith.constant 0 : i32
    %c0_i32_0 = arith.constant 0 : i32
    %c0_i32_1 = arith.constant 0 : i32
    return %c0_i32, %c0_i32_0 : i32, i32
  }
  func.func @transform_3(%arg0: i32, %arg1: i32) -> (i32, i32) {
    %c0_i32 = arith.constant 0 : i32
    %c0_i32_0 = arith.constant 0 : i32
    return %arg1, %c0_i32 : i32, i32
  }
  func.func @transform_4(%arg0: i32, %arg1: i32) -> (i32, i32) {
    %c0_i32 = arith.constant 0 : i32
    %c0_i32_0 = arith.constant 0 : i32
    %c0_i32_1 = arith.constant 0 : i32
    return %c0_i32, %c0_i32_0 : i32, i32
  }
  func.func @transform_5(%arg0: i32, %arg1: i32) -> (i32, i32) {
    %c0_i32 = arith.constant 0 : i32
    %c0_i32_0 = arith.constant 0 : i32
    return %arg0, %c0_i32 : i32, i32
  }
}

</mosaic_0001>

<llo_original>
// kernel: tpu_custom_call.1
$region0: #{tpu_custom_call.1}
  #allocation0 [shape = 'u32[]', space=smem, size = 0x4, offset = 0x4, fixed_abs, tag = 'smem constant byte address 0x4 - core index']
  #allocation1 [shape = 'u32[144,128]{1,0:T(1,128)}', space=vmem, size = 0x12000, scoped, tag = 'internal scratch']
  %s0 = inlined_call_operand.hbm [shape: f32[16,128], index: 0, kind: input, shape index: {}]
  %s1 = inlined_call_operand.hbm [shape: f32[128,128], index: 1, kind: input, shape index: {}]
  %s2 = inlined_call_operand.vmem [shape: f32[1,128], index: 2, kind: input, shape index: {}]
  %s3 = inlined_call_operand.hbm [shape: f32[128,128], index: 3, kind: input, shape index: {}]
  %s4 = inlined_call_operand.vmem [shape: f32[1,128], index: 4, kind: input, shape index: {}]
  %s5 = inlined_call_operand.hbm [shape: f32[16,128], index: 5, kind: output, shape index: {}]
  %s6 = sld [smem:[#allocation0]]
  $region46: #{tpu_custom_call.1} parent=0
    _
  %s8 = ssub.s32 1, %s6
  %s9 = scalar_select 0, %s8, %s6
  $region1: #{tpu_custom_call.1} parent=0
    #allocation2 [shape = 'u8[8192]{0}', space=vmem, size = 0x2000, scoped, tag = 'input window, operand 0, single buffered']
    #allocation3 [shape = 's32[1]{0}', space=sflag, size = 0x4, scoped, tag = 'scoped memory for tpu_custom_call.1']
    #allocation4 [shape = 's32[1]{0}', space=sflag, size = 0x4, scoped, tag = 'scoped memory for tpu_custom_call.1']
    #allocation5 [shape = 'u8[65536]{0}', space=vmem, size = 0x10000, scoped, tag = 'input window, operand 1, single buffered']
    #allocation6 [shape = 's32[1]{0}', space=sflag, size = 0x4, scoped, tag = 'scoped memory for tpu_custom_call.1']
    #allocation7 [shape = 'u8[65536]{0}', space=vmem, size = 0x10000, scoped, tag = 'input window, operand 3, single buffered']
    #allocation8 [shape = 'u8[8192]{0}', space=vmem, size = 0x2000, scoped, tag = 'output window, operand 0, single buffered']
    %10 = vsyncpa [#allocation3], 0
    %11 = vsyncpa [#allocation6], 0
    %12 = vsyncpa [#allocation4], 0
    // Predicated region
    $region2: #{tpu_custom_call.1} parent=1 // pred_check
      _
    $region3: #{tpu_custom_call.1} parent=1 // pred_check_branch
      %14 = sbr.rel (0) target = $region5
    $region4: #{tpu_custom_call.1} parent=1 // pred_region
      %s16 = ssub.s32 256, 256
      %17 = vsyncadd [#allocation3], %s16
      %s18 = sshll.u32 [#allocation2], 4
      %s19 = int_to_ptr.vmem [resolvable:$true] %s18
      %24 = dma.hbm_to_vmem [thread:$0]  %s0, 256, %s19, [#allocation3], 128, 128, 8
    $region5: #{tpu_custom_call.1} parent=1 // pred_fallthru
      _
    // Predicated region
    $region6: #{tpu_custom_call.1} parent=1 // pred_check
      _
    $region7: #{tpu_custom_call.1} parent=1 // pred_check_branch
      %26 = sbr.rel (0) target = $region9
    $region8: #{tpu_custom_call.1} parent=1 // pred_region
      %s28 = ssub.s32 2048, 2048
      %29 = vsyncadd [#allocation6], %s28
      %s30 = sshll.u32 [#allocation5], 4
      %s31 = int_to_ptr.vmem [resolvable:$true] %s30
      %36 = dma.hbm_to_vmem [thread:$0]  %s1, 2048, %s31, [#allocation6], 128, 128, 8
    $region9: #{tpu_custom_call.1} parent=1 // pred_fallthru
      _
    // Predicated region
    $region10: #{tpu_custom_call.1} parent=1 // pred_check
      _
    $region11: #{tpu_custom_call.1} parent=1 // pred_check_branch
      %38 = sbr.rel (0) target = $region13
    $region12: #{tpu_custom_call.1} parent=1 // pred_region
      _
    $region13: #{tpu_custom_call.1} parent=1 // pred_fallthru
      _
    // Predicated region
    $region14: #{tpu_custom_call.1} parent=1 // pred_check
      _
    $region15: #{tpu_custom_call.1} parent=1 // pred_check_branch
      %40 = sbr.rel (0) target = $region17
    $region16: #{tpu_custom_call.1} parent=1 // pred_region
      %s42 = ssub.s32 2048, 2048
      %43 = vsyncadd [#allocation6], %s42
      %s44 = sshll.u32 [#allocation7], 4
      %s45 = int_to_ptr.vmem [resolvable:$true] %s44
      %50 = dma.hbm_to_vmem [thread:$0]  %s3, 2048, %s45, [#allocation6], 128, 128, 8
    $region17: #{tpu_custom_call.1} parent=1 // pred_fallthru
      _
    // Predicated region
    $region18: #{tpu_custom_call.1} parent=1 // pred_check
      _
    $region19: #{tpu_custom_call.1} parent=1 // pred_check_branch
      %52 = sbr.rel (0) target = $region21
    $region20: #{tpu_custom_call.1} parent=1 // pred_region
      _
    $region21: #{tpu_custom_call.1} parent=1 // pred_fallthru
      _
    // Predicated region
    $region22: #{tpu_custom_call.1} parent=1 // pred_check
      _
    $region23: #{tpu_custom_call.1} parent=1 // pred_check_branch
      %54 = sbr.rel (0) target = $region25
    $region24: #{tpu_custom_call.1} parent=1 // pred_region
      %55 = dma.done [#allocation3], 256
    $region25: #{tpu_custom_call.1} parent=1 // pred_fallthru
      _
    // Predicated region
    $region26: #{tpu_custom_call.1} parent=1 // pred_check
      _
    $region27: #{tpu_custom_call.1} parent=1 // pred_check_branch
      %57 = sbr.rel (0) target = $region29
    $region28: #{tpu_custom_call.1} parent=1 // pred_region
      %58 = dma.done [#allocation6], 2048
    $region29: #{tpu_custom_call.1} parent=1 // pred_fallthru
      _
    // Predicated region
    $region30: #{tpu_custom_call.1} parent=1 // pred_check
      _
    $region31: #{tpu_custom_call.1} parent=1 // pred_check_branch
      %60 = sbr.rel (0) target = $region33
    $region32: #{tpu_custom_call.1} parent=1 // pred_region
      %61 = dma.done [#allocation6], 2048
    $region33: #{tpu_custom_call.1} parent=1 // pred_fallthru
      _
    %p62 = scmp.eq.s32.totalorder 0, 0
    // Predicated region
    $region34: #{tpu_custom_call.1} parent=1 // pred_check
      %p63 = pneg %p62
    $region35: #{tpu_custom_call.1} parent=1 // pred_check_branch
      %65 = sbr.rel (%p63) target = $region37
    $region36: #{tpu_custom_call.1} parent=1 // pred_region
      %v66 = vld [vmem:[%s4] sm:$0x1]
      %v68 = vlaneseq
      %v69 = vshrl.u32 %v68, 7
      %v70 = vsub.s32 0, %v69
      %v71 = vrot.slane %v66, %v70
      %73 = vst [vmem:[#allocation8] sm:$0xff] %v71
      %74 = vst [vmem:[#allocation8 + $0x8] sm:$0xff] %v71
    $region37: #{tpu_custom_call.1} parent=1 // pred_fallthru
      _
    %v75 = vld [vmem:[#allocation2] sm:$0xff]
    %v76 = vld [vmem:[#allocation2 + $0x8] sm:$0xff]
    %v77 = vld [vmem:[#allocation5] sm:$0xff]
    %v78 = vld [vmem:[#allocation5 + $0x8] sm:$0xff]
    %v79 = vld [vmem:[#allocation5 + $0x10] sm:$0xff]
    %v80 = vld [vmem:[#allocation5 + $0x18] sm:$0xff]
    %v81 = vld [vmem:[#allocation5 + $0x20] sm:$0xff]
    %v82 = vld [vmem:[#allocation5 + $0x28] sm:$0xff]
    %v83 = vld [vmem:[#allocation5 + $0x30] sm:$0xff]
    %v84 = vld [vmem:[#allocation5 + $0x38] sm:$0xff]
    %v85 = vld [vmem:[#allocation5 + $0x40] sm:$0xff]
    %v86 = vld [vmem:[#allocation5 + $0x48] sm:$0xff]
    %v87 = vld [vmem:[#allocation5 + $0x50] sm:$0xff]
    %v88 = vld [vmem:[#allocation5 + $0x58] sm:$0xff]
    %v89 = vld [vmem:[#allocation5 + $0x60] sm:$0xff]
    %v90 = vld [vmem:[#allocation5 + $0x68] sm:$0xff]
    %v91 = vld [vmem:[#allocation5 + $0x70] sm:$0xff]
    %v92 = vld [vmem:[#allocation5 + $0x78] sm:$0xff]
    %s93 = smul.u32 0, 128
    %s94 = sshra.s32 %s93, 7
    %s95 = sand.u32 %s93, 127
    %s96 = scalar_lea.vmem %s2, %s94
    %v97 = vld [vmem:[%s96] sm:$0x1]
    %v99 = vlaneseq
    %v100 = vshrl.u32 %v99, 7
    %v101 = vsub.s32 0, %v100
    %v102 = vrot.slane %v97, %v101
    %104 = vmatprep.subr.mxu0 0.0
    %105 = vmatpush1.msra.mxu0 %v77
    %106 = vmatprep.subr.mxu0 0.0
    %107 = vmatpush1.msra.mxu0 %v78
    %108 = vmatprep.subr.mxu0 0.0
    %109 = vmatpush1.msra.mxu0 %v79
    %110 = vmatprep.subr.mxu0 0.0
    %111 = vmatpush1.msra.mxu0 %v80
    %112 = vmatprep.subr.mxu0 0.0
    %113 = vmatpush1.msra.mxu0 %v81
    %114 = vmatprep.subr.mxu0 0.0
    %115 = vmatpush1.msra.mxu0 %v82
    %116 = vmatprep.subr.mxu0 0.0
    %117 = vmatpush1.msra.mxu0 %v83
    %118 = vmatprep.subr.mxu0 0.0
    %119 = vmatpush1.msra.mxu0 %v84
    %120 = vmatprep.subr.mxu0 0.0
    %121 = vmatpush1.msra.mxu0 %v85
    %122 = vmatprep.subr.mxu0 0.0
    %123 = vmatpush1.msra.mxu0 %v86
    %124 = vmatprep.subr.mxu0 0.0
    %125 = vmatpush1.msra.mxu0 %v87
    %126 = vmatprep.subr.mxu0 0.0
    %127 = vmatpush1.msra.mxu0 %v88
    %128 = vmatprep.subr.mxu0 0.0
    %129 = vmatpush1.msra.mxu0 %v89
    %130 = vmatprep.subr.mxu0 0.0
    %131 = vmatpush1.msra.mxu0 %v90
    %132 = vmatprep.subr.mxu0 0.0
    %133 = vmatpush1.msra.mxu0 %v91
    %134 = vmatprep.subr.mxu0 0.0
    %135 = vmatpush1.msra.mxu0 %v92
    %136 = vmatprep.subr.mxu0 0.0
    %137 = vmatpush1.msra.mxu0 0.0
    %138 = vmatprep.subr.mxu0 0.0
    %139 = vmatpush1.msra.mxu0 0.0
    %140 = vmatprep.subr.mxu0 0.0
    %141 = vmatpush1.msra.mxu0 0.0
    %142 = vmatprep.subr.mxu0 0.0
    %143 = vmatpush1.msra.mxu0 0.0
    %144 = vmatprep.subr.mxu0 0.0
    %145 = vmatpush1.msra.mxu0 0.0
    %146 = vmatprep.subr.mxu0 0.0
    %147 = vmatpush1.msra.mxu0 0.0
    %148 = vmatprep.subr.mxu0 0.0
    %149 = vmatpush1.msra.mxu0 0.0
    %150 = vmatprep.subr.mxu0 0.0
    %151 = vmatpush1.msra.mxu0 0.0
    %152 = vmatprep.subr.mxu0 0.0
    %153 = vmatpush1.msra.mxu0 0.0
    %154 = vmatprep.subr.mxu0 0.0
    %155 = vmatpush1.msra.mxu0 0.0
    %156 = vmatprep.subr.mxu0 0.0
    %157 = vmatpush1.msra.mxu0 0.0
    %158 = vmatprep.subr.mxu0 0.0
    %159 = vmatpush1.msra.mxu0 0.0
    %160 = vmatprep.subr.mxu0 0.0
    %161 = vmatpush1.msra.mxu0 0.0
    %162 = vmatprep.subr.mxu0 0.0
    %163 = vmatpush1.msra.mxu0 0.0
    %164 = vmatprep.subr.mxu0 0.0
    %165 = vmatpush1.msra.mxu0 0.0
    %166 = vmatprep.subr.mxu0 0.0
    %167 = vmatpush1.msra.mxu0 0.0
    %168 = vmatprep.mubr.f32.mxu0 0.0
    %169 = vmatmul.mubr.f32.gmra.mrb[0].mxu0 %v75
    %v170 = vpop.f32.mrb[0].mxu0
    %v171 = vadd.f32 %v102, %v170
    %v172 = vpop.f32.mrb[0].mxu0
    %173 = vmatprep.mubr.f32.mxu0 0.0
    %174 = vmatmul.mubr.f32.gmra.mrb[0].mxu0 %v76
    %v175 = vpop.f32.mrb[0].mxu0
    %v176 = vadd.f32 %v102, %v175
    %v177 = vpop.f32.mrb[0].mxu0
    %178 = vdwg.mxu0
    %v179 = vmul.f32 %v171, 0.5
    %v180 = vmul.f32 %v176, 0.5
    %v181 = vrcp.pop 1.4142135
    %v182 = vmul.f32 %v171, %v181
    %v183 = vmul.f32 %v176, %v181
    %v184 = verf.f32.pop %v182
    %v185 = verf.f32.pop %v183
    %v186 = vadd.f32 %v184, 1.0
    %v187 = vadd.f32 %v185, 1.0
    %v188 = vmul.f32 %v179, %v186
    %v189 = vmul.f32 %v180, %v187
    %v190 = vld [vmem:[#allocation8] sm:$0xff]
    %v191 = vld [vmem:[#allocation8 + $0x8] sm:$0xff]
    %v192 = vld [vmem:[#allocation7] sm:$0xff]
    %v193 = vld [vmem:[#allocation7 + $0x8] sm:$0xff]
    %v194 = vld [vmem:[#allocation7 + $0x10] sm:$0xff]
    %v195 = vld [vmem:[#allocation7 + $0x18] sm:$0xff]
    %v196 = vld [vmem:[#allocation7 + $0x20] sm:$0xff]
    %v197 = vld [vmem:[#allocation7 + $0x28] sm:$0xff]
    %v198 = vld [vmem:[#allocation7 + $0x30] sm:$0xff]
    %v199 = vld [vmem:[#allocation7 + $0x38] sm:$0xff]
    %v200 = vld [vmem:[#allocation7 + $0x40] sm:$0xff]
    %v201 = vld [vmem:[#allocation7 + $0x48] sm:$0xff]
    %v202 = vld [vmem:[#allocation7 + $0x50] sm:$0xff]
    %v203 = vld [vmem:[#allocation7 + $0x58] sm:$0xff]
    %v204 = vld [vmem:[#allocation7 + $0x60] sm:$0xff]
    %v205 = vld [vmem:[#allocation7 + $0x68] sm:$0xff]
    %v206 = vld [vmem:[#allocation7 + $0x70] sm:$0xff]
    %v207 = vld [vmem:[#allocation7 + $0x78] sm:$0xff]
    %208 = vmatprep.subr.mxu0 0.0
    %209 = vmatpush1.msra.mxu0 %v192
    %210 = vmatprep.subr.mxu0 0.0
    %211 = vmatpush1.msra.mxu0 %v193
    %212 = vmatprep.subr.mxu0 0.0
    %213 = vmatpush1.msra.mxu0 %v194
    %214 = vmatprep.subr.mxu0 0.0
    %215 = vmatpush1.msra.mxu0 %v195
    %216 = vmatprep.subr.mxu0 0.0
    %217 = vmatpush1.msra.mxu0 %v196
    %218 = vmatprep.subr.mxu0 0.0
    %219 = vmatpush1.msra.mxu0 %v197
    %220 = vmatprep.subr.mxu0 0.0
    %221 = vmatpush1.msra.mxu0 %v198
    %222 = vmatprep.subr.mxu0 0.0
    %223 = vmatpush1.msra.mxu0 %v199
    %224 = vmatprep.subr.mxu0 0.0
    %225 = vmatpush1.msra.mxu0 %v200
    %226 = vmatprep.subr.mxu0 0.0
    %227 = vmatpush1.msra.mxu0 %v201
    %228 = vmatprep.subr.mxu0 0.0
    %229 = vmatpush1.msra.mxu0 %v202
    %230 = vmatprep.subr.mxu0 0.0
    %231 = vmatpush1.msra.mxu0 %v203
    %232 = vmatprep.subr.mxu0 0.0
    %233 = vmatpush1.msra.mxu0 %v204
    %234 = vmatprep.subr.mxu0 0.0
    %235 = vmatpush1.msra.mxu0 %v205
    %236 = vmatprep.subr.mxu0 0.0
    %237 = vmatpush1.msra.mxu0 %v206
    %238 = vmatprep.subr.mxu0 0.0
    %239 = vmatpush1.msra.mxu0 %v207
    %240 = vmatprep.subr.mxu0 0.0
    %241 = vmatpush1.msra.mxu0 0.0
    %242 = vmatprep.subr.mxu0 0.0
    %243 = vmatpush1.msra.mxu0 0.0
    %244 = vmatprep.subr.mxu0 0.0
    %245 = vmatpush1.msra.mxu0 0.0
    %246 = vmatprep.subr.mxu0 0.0
    %247 = vmatpush1.msra.mxu0 0.0
    %248 = vmatprep.subr.mxu0 0.0
    %249 = vmatpush1.msra.mxu0 0.0
    %250 = vmatprep.subr.mxu0 0.0
    %251 = vmatpush1.msra.mxu0 0.0
    %252 = vmatprep.subr.mxu0 0.0
    %253 = vmatpush1.msra.mxu0 0.0
    %254 = vmatprep.subr.mxu0 0.0
    %255 = vmatpush1.msra.mxu0 0.0
    %256 = vmatprep.subr.mxu0 0.0
    %257 = vmatpush1.msra.mxu0 0.0
    %258 = vmatprep.subr.mxu0 0.0
    %259 = vmatpush1.msra.mxu0 0.0
    %260 = vmatprep.subr.mxu0 0.0
    %261 = vmatpush1.msra.mxu0 0.0
    %262 = vmatprep.subr.mxu0 0.0
    %263 = vmatpush1.msra.mxu0 0.0
    %264 = vmatprep.subr.mxu0 0.0
    %265 = vmatpush1.msra.mxu0 0.0
    %266 = vmatprep.subr.mxu0 0.0
    %267 = vmatpush1.msra.mxu0 0.0
    %268 = vmatprep.subr.mxu0 0.0
    %269 = vmatpush1.msra.mxu0 0.0
    %270 = vmatprep.subr.mxu0 0.0
    %271 = vmatpush1.msra.mxu0 0.0
    %272 = vmatprep.mubr.f32.mxu0 0.0
    %273 = vmatmul.mubr.f32.gmra.mrb[0].mxu0 %v188
    %v274 = vpop.f32.mrb[0].mxu0
    %v275 = vadd.f32 0.0, %v274
    %v276 = vpop.f32.mrb[0].mxu0
    %277 = vmatprep.mubr.f32.mxu0 0.0
    %278 = vmatmul.mubr.f32.gmra.mrb[0].mxu0 %v189
    %v279 = vpop.f32.mrb[0].mxu0
    %v280 = vadd.f32 0.0, %v279
    %v281 = vpop.f32.mrb[0].mxu0
    %282 = vdwg.mxu0
    %v283 = vadd.f32 %v190, %v275
    %v284 = vadd.f32 %v191, %v280
    %285 = vst [vmem:[#allocation8] sm:$0xff] %v283
    %286 = vst [vmem:[#allocation8 + $0x8] sm:$0xff] %v284
    // Predicated region
    $region38: #{tpu_custom_call.1} parent=1 // pred_check
      _
    $region39: #{tpu_custom_call.1} parent=1 // pred_check_branch
      %288 = sbr.rel (0) target = $region41
    $region40: #{tpu_custom_call.1} parent=1 // pred_region
      %s290 = ssub.s32 256, 256
      %291 = vsyncadd [#allocation4], %s290
      %s292 = sshll.u32 [#allocation8], 4
      %s293 = int_to_ptr.vmem [resolvable:$true] %s292
      %298 = dma.vmem_to_hbm [thread:$0]  %s293, 256, %s5, [#allocation4], 128, 128, 8
    $region41: #{tpu_custom_call.1} parent=1 // pred_fallthru
      _
    // Predicated region
    $region42: #{tpu_custom_call.1} parent=1 // pred_check
      _
    $region43: #{tpu_custom_call.1} parent=1 // pred_check_branch
      %300 = sbr.rel (0) target = $region45
    $region44: #{tpu_custom_call.1} parent=1 // pred_region
      %301 = dma.done [#allocation4], 256
    $region45: #{tpu_custom_call.1} parent=1 // pred_fallthru
      _
    %302 = vsyncpa [#allocation3], 1
    %303 = vsyncpa [#allocation6], 1
    %304 = vsyncpa [#allocation4], 1

</llo_original>
